<compile_context>
chip_gen: v5e
topology: v5e:2x2
jax: 0.10.0
libtpu: 0.0.40
codegen_flags: <defaults>
</compile_context>

<pallas_src>
import functools

import jax
import jax.numpy as jnp
from jax.experimental import pallas as pl
from jax.experimental.pallas import tpu as pltpu

LN_EPS = 1e-5


def _round_up(a, b):
    return (a + b - 1) // b * b


def _transition_kernel(xT_ref, w1T_ref, b1_ref, g_ref, beta_ref, w2T_ref,
                       b2_ref, oT_ref):
    """One (D, TM) column slab:  Linear -> LayerNorm -> ReLU -> Linear."""
    # ---- Linear 1 (MXU): (H, D) @ (D, TM) -> (H, TM), f32 accumulation ----
    h = jnp.dot(w1T_ref[...], xT_ref[...],
                preferred_element_type=jnp.float32)
    h = h + b1_ref[...]                                    # (H, 1) broadcast

    # ---- LayerNorm over hidden axis (sublanes), one-pass statistics ----
    inv_h = 1.0 / h.shape[0]
    mean = jnp.sum(h, axis=0, keepdims=True) * inv_h       # (1, TM)
    ms = jnp.sum(h * h, axis=0, keepdims=True) * inv_h     # (1, TM)
    var = ms - mean * mean
    inv_std = jax.lax.rsqrt(var + LN_EPS)
    hn = (h - mean) * inv_std
    hn = hn * g_ref[...] + beta_ref[...]

    # ---- ReLU ----
    hn = jnp.maximum(hn, 0.0)

    # ---- Linear 2 (MXU): (D, H) @ (H, TM) -> (D, TM) ----
    out = jnp.dot(w2T_ref[...], hn.astype(w2T_ref.dtype),
                  preferred_element_type=jnp.float32)
    oT_ref[...] = (out + b2_ref[...]).astype(oT_ref.dtype)


@functools.partial(jax.jit, static_argnames=("row_tile",))
def transition_simple_forward(x, params, *, row_tile=1024):
    """x: (batch, num_slots, slot_dim) -> (y, None) like the PyTorch module."""
    w1, b1, gamma, beta, w2, b2 = (params["w1"], params["b1"], params["gamma"],
                                   params["beta"], params["w2"], params["b2"])
    B, S, D = x.shape
    H = w1.shape[1]
    N = B * S

    # Lane-dense row tile: multiple of 128, capped by row_tile, >= N if tiny.
    TM = min(int(row_tile), _round_up(max(N, 1), 128))
    TM = _round_up(TM, 128)
    N_pad = _round_up(N, TM)

    # Rows-on-lanes layout (layout plumbing done once, outside the grid).
    xT = x.reshape(N, D).T                                  # (D, N)
    if N_pad != N:
        xT = jnp.pad(xT, ((0, 0), (0, N_pad - N)))

    # Hoist invariant reshapes / casts out of the kernel.
    f32 = jnp.float32
    w1T = w1.T                                              # (H, D)
    w2T = w2.T                                              # (D, H)
    b1c = b1.astype(f32).reshape(H, 1)
    gc = gamma.astype(f32).reshape(H, 1)
    bc = beta.astype(f32).reshape(H, 1)
    b2c = b2.astype(f32).reshape(D, 1)

    const = lambda i: (0, 0)
    yT = pl.pallas_call(
        _transition_kernel,
        out_shape=jax.ShapeDtypeStruct((D, N_pad), x.dtype),
        grid=(N_pad // TM,),
        in_specs=[
            pl.BlockSpec((D, TM), lambda i: (0, i)),        # xT slab
            pl.BlockSpec((H, D), const),                    # W1^T
            pl.BlockSpec((H, 1), const),                    # b1
            pl.BlockSpec((H, 1), const),                    # gamma
            pl.BlockSpec((H, 1), const),                    # beta
            pl.BlockSpec((D, H), const),                    # W2^T
            pl.BlockSpec((D, 1), const),                    # b2
        ],
        out_specs=pl.BlockSpec((D, TM), lambda i: (0, i)),
        compiler_params=pltpu.CompilerParams(
            dimension_semantics=("parallel",),
            vmem_limit_bytes=32 * 1024 * 1024,              # safe on v5e/v6e/v7x
        ),
    )(xT, w1T, b1c, gc, bc, w2T, b2c)

    y = yT[:, :N].T.reshape(B, S, D)
    return y, None


def init_params(key, slot_dim, hidden_dim, dtype=jnp.float32):
    k1, k2, k3, k4 = jax.random.split(key, 4)
    lim1 = 1.0 / jnp.sqrt(slot_dim)
    lim2 = 1.0 / jnp.sqrt(hidden_dim)
    return {
        "w1": jax.random.uniform(k1, (slot_dim, hidden_dim), dtype, -lim1, lim1),
        "b1": jax.random.uniform(k2, (hidden_dim,), dtype, -lim1, lim1),
        "gamma": jnp.ones((hidden_dim,), dtype),
        "beta": jnp.zeros((hidden_dim,), dtype),
        "w2": jax.random.uniform(k3, (hidden_dim, slot_dim), dtype, -lim2, lim2),
        "b2": jax.random.uniform(k4, (slot_dim,), dtype, -lim2, lim2),
    }


def _reference(x, p):
    h = x @ p["w1"] + p["b1"]
    mean = h.mean(-1, keepdims=True)
    var = ((h - mean) ** 2).mean(-1, keepdims=True)
    h = (h - mean) * jax.lax.rsqrt(var + LN_EPS) * p["gamma"] + p["beta"]
    h = jnp.maximum(h, 0.0)
    return h @ p["w2"] + p["b2"]


if __name__ == "__main__":
    batch, num_slots, slot_dim, hidden_dim = 2, 4, 16, 32

    key = jax.random.PRNGKey(0)
    kx, kp = jax.random.split(key)
    x = jax.random.normal(kx, (batch, num_slots, slot_dim), jnp.float32)
    params = init_params(kp, slot_dim, hidden_dim)

    y, mem = transition_simple_forward(x, params)
    y = jax.block_until_ready(y)

    y_ref = _reference(x, params)
    assert mem is None
    assert y.shape == (batch, num_slots, slot_dim)
    max_err = float(jnp.max(jnp.abs(y - y_ref)))
    assert jnp.allclose(y, y_ref, atol=2e-5, rtol=2e-5), max_err

    print("KERNEL_OK")
</pallas_src>

<mosaic_0001>
module attributes {stable_mosaic.version = 11 : i64} {
  func.func @_transition_kernel(%arg0: i32, %arg1: memref<16x128xf32, #tpu.memory_space<vmem>>, %arg2: memref<32x16xf32, #tpu.memory_space<vmem>>, %arg3: memref<32x1xf32, #tpu.memory_space<vmem>>, %arg4: memref<32x1xf32, #tpu.memory_space<vmem>>, %arg5: memref<32x1xf32, #tpu.memory_space<vmem>>, %arg6: memref<16x32xf32, #tpu.memory_space<vmem>>, %arg7: memref<16x1xf32, #tpu.memory_space<vmem>>, %arg8: memref<16x128xf32, #tpu.memory_space<vmem>>) attributes {dimension_semantics = [#tpu.dimension_semantics<parallel>], iteration_bounds = array<i64: 1>, scalar_prefetch = 0 : i64, scratch_operands = 0 : i64, tpu.core_type = #tpu.core_type<tc>, window_params = [{transform_indices = @transform_0, window_bounds = array<i64: 16, 128>}, {pipeline_mode = #tpu.pipeline_mode<synchronous>, transform_indices = @transform_1, window_bounds = array<i64: 32, 16>}, {pipeline_mode = #tpu.pipeline_mode<synchronous>, transform_indices = @transform_2, window_bounds = array<i64: 32, 1>}, {pipeline_mode = #tpu.pipeline_mode<synchronous>, transform_indices = @transform_3, window_bounds = array<i64: 32, 1>}, {pipeline_mode = #tpu.pipeline_mode<synchronous>, transform_indices = @transform_4, window_bounds = array<i64: 32, 1>}, {pipeline_mode = #tpu.pipeline_mode<synchronous>, transform_indices = @transform_5, window_bounds = array<i64: 16, 32>}, {pipeline_mode = #tpu.pipeline_mode<synchronous>, transform_indices = @transform_6, window_bounds = array<i64: 16, 1>}, {transform_indices = @transform_7, window_bounds = array<i64: 16, 128>}]} {
    %c0 = arith.constant 0 : index
    %c0_0 = arith.constant 0 : index
    %0 = vector.load %arg2[%c0, %c0_0] : memref<32x16xf32, #tpu.memory_space<vmem>>, vector<32x16xf32>
    %c0_1 = arith.constant 0 : index
    %c0_2 = arith.constant 0 : index
    %1 = vector.load %arg1[%c0_1, %c0_2] : memref<16x128xf32, #tpu.memory_space<vmem>>, vector<16x128xf32>
    %cst = arith.constant dense<0.000000e+00> : vector<32x128xf32>
    %2 = tpu.matmul %0, %1, %cst {dimension_numbers = #tpu.dot_dimension_numbers<[1], [0], [0], [1], [0, 0, 1, 1], [], []>} : vector<32x16xf32>, vector<16x128xf32>, vector<32x128xf32> -> vector<32x128xf32>
    %c0_3 = arith.constant 0 : index
    %c0_4 = arith.constant 0 : index
    %3 = vector.load %arg3[%c0_3, %c0_4] : memref<32x1xf32, #tpu.memory_space<vmem>>, vector<32x1xf32>
    %4 = vector.broadcast %3 : vector<32x1xf32> to vector<32x128xf32>
    %5 = arith.addf %2, %4 : vector<32x128xf32>
    %cst_5 = arith.constant dense<0.000000e+00> : vector<128xf32>
    %6 = vector.multi_reduction <add>, %5, %cst_5 [0] : vector<32x128xf32> to vector<128xf32>
    %7 = vector.shape_cast %6 : vector<128xf32> to vector<1x128xf32>
    %cst_6 = arith.constant 3.125000e-02 : f32
    %8 = vector.broadcast %cst_6 : f32 to vector<1x128xf32>
    %9 = arith.mulf %7, %8 : vector<1x128xf32>
    %10 = arith.mulf %5, %5 : vector<32x128xf32>
    %cst_7 = arith.constant dense<0.000000e+00> : vector<128xf32>
    %11 = vector.multi_reduction <add>, %10, %cst_7 [0] : vector<32x128xf32> to vector<128xf32>
    %12 = vector.shape_cast %11 : vector<128xf32> to vector<1x128xf32>
    %cst_8 = arith.constant 3.125000e-02 : f32
    %13 = vector.broadcast %cst_8 : f32 to vector<1x128xf32>
    %14 = arith.mulf %12, %13 : vector<1x128xf32>
    %15 = arith.mulf %9, %9 : vector<1x128xf32>
    %16 = arith.subf %14, %15 : vector<1x128xf32>
    %cst_9 = arith.constant 9.99999974E-6 : f32
    %17 = vector.broadcast %cst_9 : f32 to vector<1x128xf32>
    %18 = arith.addf %16, %17 : vector<1x128xf32>
    %19 = math.rsqrt %18 : vector<1x128xf32>
    %20 = vector.broadcast %9 : vector<1x128xf32> to vector<32x128xf32>
    %21 = arith.subf %5, %20 : vector<32x128xf32>
    %22 = vector.broadcast %19 : vector<1x128xf32> to vector<32x128xf32>
    %23 = arith.mulf %21, %22 : vector<32x128xf32>
    %c0_10 = arith.constant 0 : index
    %c0_11 = arith.constant 0 : index
    %24 = vector.load %arg4[%c0_10, %c0_11] : memref<32x1xf32, #tpu.memory_space<vmem>>, vector<32x1xf32>
    %25 = vector.broadcast %24 : vector<32x1xf32> to vector<32x128xf32>
    %26 = arith.mulf %23, %25 : vector<32x128xf32>
    %c0_12 = arith.constant 0 : index
    %c0_13 = arith.constant 0 : index
    %27 = vector.load %arg5[%c0_12, %c0_13] : memref<32x1xf32, #tpu.memory_space<vmem>>, vector<32x1xf32>
    %28 = vector.broadcast %27 : vector<32x1xf32> to vector<32x128xf32>
    %29 = arith.addf %26, %28 : vector<32x128xf32>
    %cst_14 = arith.constant 0.000000e+00 : f32
    %30 = vector.broadcast %cst_14 : f32 to vector<32x128xf32>
    %31 = arith.maximumf %29, %30 : vector<32x128xf32>
    %c0_15 = arith.constant 0 : index
    %c0_16 = arith.constant 0 : index
    %32 = vector.load %arg6[%c0_15, %c0_16] : memref<16x32xf32, #tpu.memory_space<vmem>>, vector<16x32xf32>
    %cst_17 = arith.constant dense<0.000000e+00> : vector<16x128xf32>
    %33 = tpu.matmul %32, %31, %cst_17 {dimension_numbers = #tpu.dot_dimension_numbers<[1], [0], [0], [1], [0, 0, 1, 1], [], []>} : vector<16x32xf32>, vector<32x128xf32>, vector<16x128xf32> -> vector<16x128xf32>
    %c0_18 = arith.constant 0 : index
    %c0_19 = arith.constant 0 : index
    %34 = vector.load %arg7[%c0_18, %c0_19] : memref<16x1xf32, #tpu.memory_space<vmem>>, vector<16x1xf32>
    %35 = vector.broadcast %34 : vector<16x1xf32> to vector<16x128xf32>
    %36 = arith.addf %33, %35 : vector<16x128xf32>
    %c0_20 = arith.constant 0 : index
    %c0_21 = arith.constant 0 : index
    %37 = vector.load %arg8[%c0_20, %c0_21] : memref<16x128xf32, #tpu.memory_space<vmem>>, vector<16x128xf32>
    tpu.vector_store %arg8[%c0_20, %c0_21], %36 {strides = array<i32>} : memref<16x128xf32, #tpu.memory_space<vmem>>, vector<16x128xf32>,
    return
  }
  func.func @transform_0(%arg0: i32) -> (i32, i32) {
    %c0_i32 = arith.constant 0 : i32
    %c0_i32_0 = arith.constant 0 : i32
    return %c0_i32, %arg0 : i32, i32
  }
  func.func @transform_1(%arg0: i32) -> (i32, i32) {
    %c0_i32 = arith.constant 0 : i32
    %c0_i32_0 = arith.constant 0 : i32
    %c0_i32_1 = arith.constant 0 : i32
    return %c0_i32, %c0_i32_0 : i32, i32
  }
  func.func @transform_2(%arg0: i32) -> (i32, i32) {
    %c0_i32 = arith.constant 0 : i32
    %c0_i32_0 = arith.constant 0 : i32
    %c0_i32_1 = arith.constant 0 : i32
    return %c0_i32, %c0_i32_0 : i32, i32
  }
  func.func @transform_3(%arg0: i32) -> (i32, i32) {
    %c0_i32 = arith.constant 0 : i32
    %c0_i32_0 = arith.constant 0 : i32
    %c0_i32_1 = arith.constant 0 : i32
    return %c0_i32, %c0_i32_0 : i32, i32
  }
  func.func @transform_4(%arg0: i32) -> (i32, i32) {
    %c0_i32 = arith.constant 0 : i32
    %c0_i32_0 = arith.constant 0 : i32
    %c0_i32_1 = arith.constant 0 : i32
    return %c0_i32, %c0_i32_0 : i32, i32
  }
  func.func @transform_5(%arg0: i32) -> (i32, i32) {
    %c0_i32 = arith.constant 0 : i32
    %c0_i32_0 = arith.constant 0 : i32
    %c0_i32_1 = arith.constant 0 : i32
    return %c0_i32, %c0_i32_0 : i32, i32
  }
  func.func @transform_6(%arg0: i32) -> (i32, i32) {
    %c0_i32 = arith.constant 0 : i32
    %c0_i32_0 = arith.constant 0 : i32
    %c0_i32_1 = arith.constant 0 : i32
    return %c0_i32, %c0_i32_0 : i32, i32
  }
  func.func @transform_7(%arg0: i32) -> (i32, i32) {
    %c0_i32 = arith.constant 0 : i32
    %c0_i32_0 = arith.constant 0 : i32
    return %c0_i32, %arg0 : i32, i32
  }
}

</mosaic_0001>

<llo_original>
// kernel: transition_simple_forward.1
$region0: #{transition_simple_forward.1}
  #allocation0 [shape = 'u32[]', space=smem, size = 0x4, offset = 0x4, fixed_abs, tag = 'smem constant byte address 0x4 - core index']
  #allocation1 [shape = 'u32[72,128]{1,0:T(1,128)}', space=vmem, size = 0x9000, scoped, tag = 'internal scratch']
  %s0 = inlined_call_operand.vmem [shape: f32[16,128], index: 0, kind: input, shape index: {}]
  %s1 = inlined_call_operand.vmem [shape: f32[32,16], index: 1, kind: input, shape index: {}]
  %s2 = inlined_call_operand.vmem [shape: f32[32,1], index: 2, kind: input, shape index: {}]
  %s3 = inlined_call_operand.vmem [shape: f32[32,1], index: 3, kind: input, shape index: {}]
  %s4 = inlined_call_operand.vmem [shape: f32[32,1], index: 4, kind: input, shape index: {}]
  %s5 = inlined_call_operand.vmem [shape: f32[16,32], index: 5, kind: input, shape index: {}]
  %s6 = inlined_call_operand.vmem [shape: f32[16,1], index: 6, kind: input, shape index: {}]
  %s7 = inlined_call_operand.vmem [shape: f32[16,128], index: 7, kind: output, shape index: {}]
  %s8 = sld [smem:[#allocation0]]
  $region38: #{transition_simple_forward.1} parent=0
    _
  %s10 = ssub.s32 1, %s8
  %s11 = scalar_select 0, %s10, %s8
  // Predicated region
  $region2: #{transition_simple_forward.1} parent=0 // pred_check
    _
  $region3: #{transition_simple_forward.1} parent=0 // pred_check_branch
    %13 = sbr.rel (0) target = $region5
  $region4: #{transition_simple_forward.1} parent=0 // pred_region
    _
  $region5: #{transition_simple_forward.1} parent=0 // pred_fallthru
    _
  // Predicated region
  $region6: #{transition_simple_forward.1} parent=0 // pred_check
    _
  $region7: #{transition_simple_forward.1} parent=0 // pred_check_branch
    %15 = sbr.rel (0) target = $region9
  $region8: #{transition_simple_forward.1} parent=0 // pred_region
    _
  $region9: #{transition_simple_forward.1} parent=0 // pred_fallthru
    _
  // Predicated region
  $region10: #{transition_simple_forward.1} parent=0 // pred_check
    _
  $region11: #{transition_simple_forward.1} parent=0 // pred_check_branch
    %17 = sbr.rel (0) target = $region13
  $region12: #{transition_simple_forward.1} parent=0 // pred_region
    _
  $region13: #{transition_simple_forward.1} parent=0 // pred_fallthru
    _
  // Predicated region
  $region14: #{transition_simple_forward.1} parent=0 // pred_check
    _
  $region15: #{transition_simple_forward.1} parent=0 // pred_check_branch
    %19 = sbr.rel (0) target = $region17
  $region16: #{transition_simple_forward.1} parent=0 // pred_region
    _
  $region17: #{transition_simple_forward.1} parent=0 // pred_fallthru
    _
  // Predicated region
  $region18: #{transition_simple_forward.1} parent=0 // pred_check
    _
  $region19: #{transition_simple_forward.1} parent=0 // pred_check_branch
    %21 = sbr.rel (0) target = $region21
  $region20: #{transition_simple_forward.1} parent=0 // pred_region
    _
  $region21: #{transition_simple_forward.1} parent=0 // pred_fallthru
    _
  // Predicated region
  $region22: #{transition_simple_forward.1} parent=0 // pred_check
    _
  $region23: #{transition_simple_forward.1} parent=0 // pred_check_branch
    %23 = sbr.rel (0) target = $region25
  $region24: #{transition_simple_forward.1} parent=0 // pred_region
    _
  $region25: #{transition_simple_forward.1} parent=0 // pred_fallthru
    _
  // Predicated region
  $region26: #{transition_simple_forward.1} parent=0 // pred_check
    _
  $region27: #{transition_simple_forward.1} parent=0 // pred_check_branch
    %25 = sbr.rel (0) target = $region29
  $region28: #{transition_simple_forward.1} parent=0 // pred_region
    _
  $region29: #{transition_simple_forward.1} parent=0 // pred_fallthru
    _
  %v26 = vld [vmem:[%s1] sm:$0xff]
  %v27 = vld [vmem:[%s1 + $0x8] sm:$0xff]
  %v28 = vld [vmem:[%s1 + $0x10] sm:$0xff]
  %v29 = vld [vmem:[%s1 + $0x18] sm:$0xff]
  %v30 = vld [vmem:[%s0] sm:$0xff]
  %v31 = vld [vmem:[%s0 + $0x8] sm:$0xff]
  %v32 = vld [vmem:[%s2] sm:$0xff]
  %v33 = vld [vmem:[%s2 + $0x8] sm:$0xff]
  %v34 = vld [vmem:[%s2 + $0x10] sm:$0xff]
  %v35 = vld [vmem:[%s2 + $0x18] sm:$0xff]
  %37 = vset.pattern.permute.xlu0 0
  %38 = vperm.xlu0 %37, %v32
  %v39 = vpop.permute.xlu0 %38
  %42 = vset.pattern.permute.xlu0 0
  %43 = vperm.xlu0 %42, %v33
  %v44 = vpop.permute.xlu0 %43
  %47 = vset.pattern.permute.xlu0 0
  %48 = vperm.xlu0 %47, %v34
  %v49 = vpop.permute.xlu0 %48
  %52 = vset.pattern.permute.xlu0 0
  %53 = vperm.xlu0 %52, %v35
  %v54 = vpop.permute.xlu0 %53
  %vm56 = vcmask 130048
  %v58 = vsel %vm56, %v26, 0
  %v61 = vsel %vm56, %v27, 0
  %v64 = vsel %vm56, %v28, 0
  %v67 = vsel %vm56, %v29, 0
  %69 = vmatpush.msra.mxu0 0.0
  %70 = vmatpush.msra.mxu0 0.0
  %71 = vmatpush.msra.mxu0 0.0
  %72 = vmatpush.msra.mxu0 0.0
  %73 = vmatpush.msra.mxu0 0.0
  %74 = vmatpush.msra.mxu0 0.0
  %75 = vmatpush.msra.mxu0 0.0
  %76 = vmatpush.msra.mxu0 0.0
  %77 = vmatpush.msra.mxu0 0.0
  %78 = vmatpush.msra.mxu0 0.0
  %79 = vmatpush.msra.mxu0 0.0
  %80 = vmatpush.msra.mxu0 0.0
  %81 = vmatpush.msra.mxu0 0.0
  %82 = vmatpush.msra.mxu0 0.0
  %83 = vmatpush.msra.mxu0 %v31
  %84 = vmatpush.msra.mxu0 %v30
  %85 = vmatmul.f32.gmra.mxu0 %v58
  %v86 = vpop.f32.mrf.mxu0
  %v87 = vadd.f32 %v39, %v86
  %88 = vmatmul.f32.gmra.mxu0 %v61
  %v89 = vpop.f32.mrf.mxu0
  %v90 = vadd.f32 %v44, %v89
  %91 = vmatmul.f32.gmra.mxu0 %v64
  %v92 = vpop.f32.mrf.mxu0
  %v93 = vadd.f32 %v49, %v92
  %94 = vmatmul.f32.gmra.mxu0 %v67
  %v95 = vpop.f32.mrf.mxu0
  %v96 = vadd.f32 %v54, %v95
  %97 = vdwg.mxu0
  %v98 = vadd.f32 %v87, %v90
  %v99 = vadd.f32 %v98, %v93
  %v100 = vadd.f32 %v99, %v96
  %v101 = vrot.slane %v100, 4
  %v102 = vadd.f32 %v100, %v101
  %v103 = vrot.slane %v102, 2
  %v104 = vadd.f32 %v102, %v103
  %v105 = vrot.slane %v104, 1
  %v106 = vadd.f32 %v104, %v105
  %v107 = vmul.f32 %v106, 0.03125
  %v108 = vmul.f32 %v87, %v87
  %v109 = vmul.f32 %v90, %v90
  %v110 = vmul.f32 %v93, %v93
  %v111 = vmul.f32 %v96, %v96
  %v112 = vadd.f32 %v108, %v109
  %v113 = vadd.f32 %v112, %v110
  %v114 = vadd.f32 %v113, %v111
  %v115 = vrot.slane %v114, 4
  %v116 = vadd.f32 %v114, %v115
  %v117 = vrot.slane %v116, 2
  %v118 = vadd.f32 %v116, %v117
  %v119 = vrot.slane %v118, 1
  %v120 = vadd.f32 %v118, %v119
  %v121 = vmul.f32 %v120, 0.03125
  %v122 = vmul.f32 %v107, %v107
  %v123 = vsub.f32 %v121, %v122
  %v124 = vadd.f32 %v123, 1e-05
  %v125 = vrsqrt.pop %v124
  %v126 = vmul.f32 %v125, %v124
  %v127 = vmul.f32 %v126, %v125
  %v128 = vmul.f32 0.5, %v127
  %v129 = vsub.f32 1.5, %v128
  %v130 = vmul.f32 %v125, %v129
  %vm131 = vweird.f32 %v124
  %vm132 = vweird.f32 %v125
  %vm133 = vmor %vm131, %vm132
  %v134 = vsel %vm133, %v125, %v130
  %v135 = vsub.f32 %v87, %v107
  %v136 = vsub.f32 %v90, %v107
  %v137 = vsub.f32 %v93, %v107
  %v138 = vsub.f32 %v96, %v107
  %v139 = vmul.f32 %v135, %v134
  %v140 = vmul.f32 %v136, %v134
  %v141 = vmul.f32 %v137, %v134
  %v142 = vmul.f32 %v138, %v134
  %v143 = vld [vmem:[%s3] sm:$0xff]
  %v144 = vld [vmem:[%s3 + $0x8] sm:$0xff]
  %v145 = vld [vmem:[%s3 + $0x10] sm:$0xff]
  %v146 = vld [vmem:[%s3 + $0x18] sm:$0xff]
  %148 = vset.pattern.permute.xlu0 0
  %149 = vperm.xlu0 %148, %v143
  %v150 = vpop.permute.xlu0 %149
  %153 = vset.pattern.permute.xlu0 0
  %154 = vperm.xlu0 %153, %v144
  %v155 = vpop.permute.xlu0 %154
  %158 = vset.pattern.permute.xlu0 0
  %159 = vperm.xlu0 %158, %v145
  %v160 = vpop.permute.xlu0 %159
  %163 = vset.pattern.permute.xlu0 0
  %164 = vperm.xlu0 %163, %v146
  %v165 = vpop.permute.xlu0 %164
  %v167 = vmul.f32 %v139, %v150
  %v168 = vmul.f32 %v140, %v155
  %v169 = vmul.f32 %v141, %v160
  %v170 = vmul.f32 %v142, %v165
  %v171 = vld [vmem:[%s4] sm:$0xff]
  %v172 = vld [vmem:[%s4 + $0x8] sm:$0xff]
  %v173 = vld [vmem:[%s4 + $0x10] sm:$0xff]
  %v174 = vld [vmem:[%s4 + $0x18] sm:$0xff]
  %176 = vset.pattern.permute.xlu0 0
  %177 = vperm.xlu0 %176, %v171
  %v178 = vpop.permute.xlu0 %177
  %181 = vset.pattern.permute.xlu0 0
  %182 = vperm.xlu0 %181, %v172
  %v183 = vpop.permute.xlu0 %182
  %186 = vset.pattern.permute.xlu0 0
  %187 = vperm.xlu0 %186, %v173
  %v188 = vpop.permute.xlu0 %187
  %191 = vset.pattern.permute.xlu0 0
  %192 = vperm.xlu0 %191, %v174
  %v193 = vpop.permute.xlu0 %192
  %v195 = vadd.f32 %v167, %v178
  %v196 = vadd.f32 %v168, %v183
  %v197 = vadd.f32 %v169, %v188
  %v198 = vadd.f32 %v170, %v193
  %v199 = vmax.f32 %v195, 0.0
  %v200 = vmax.f32 %v196, 0.0
  %v201 = vmax.f32 %v197, 0.0
  %v202 = vmax.f32 %v198, 0.0
  %v203 = vld [vmem:[%s5] sm:$0xff]
  %v204 = vld [vmem:[%s5 + $0x8] sm:$0xff]
  %v205 = vld [vmem:[%s6] sm:$0xff]
  %v206 = vld [vmem:[%s6 + $0x8] sm:$0xff]
  %208 = vset.pattern.permute.xlu0 0
  %209 = vperm.xlu0 %208, %v205
  %v210 = vpop.permute.xlu0 %209
  %213 = vset.pattern.permute.xlu0 0
  %214 = vperm.xlu0 %213, %v206
  %v215 = vpop.permute.xlu0 %214
  %vm217 = vcmask 261120
  %v219 = vsel %vm217, %v203, 0
  %v222 = vsel %vm217, %v204, 0
  %224 = vmatpush.msra.mxu0 0.0
  %225 = vmatpush.msra.mxu0 0.0
  %226 = vmatpush.msra.mxu0 0.0
  %227 = vmatpush.msra.mxu0 0.0
  %228 = vmatpush.msra.mxu0 0.0
  %229 = vmatpush.msra.mxu0 0.0
  %230 = vmatpush.msra.mxu0 0.0
  %231 = vmatpush.msra.mxu0 0.0
  %232 = vmatpush.msra.mxu0 0.0
  %233 = vmatpush.msra.mxu0 0.0
  %234 = vmatpush.msra.mxu0 0.0
  %235 = vmatpush.msra.mxu0 0.0
  %236 = vmatpush.msra.mxu0 %v202
  %237 = vmatpush.msra.mxu0 %v201
  %238 = vmatpush.msra.mxu0 %v200
  %239 = vmatpush.msra.mxu0 %v199
  %240 = vmatmul.f32.gmra.mxu0 %v219
  %v241 = vpop.f32.mrf.mxu0
  %v242 = vadd.f32 %v210, %v241
  %243 = vmatmul.f32.gmra.mxu0 %v222
  %v244 = vpop.f32.mrf.mxu0
  %v245 = vadd.f32 %v215, %v244
  %246 = vdwg.mxu0
  %247 = vst [vmem:[%s7] sm:$0xff] %v242
  %248 = vst [vmem:[%s7 + $0x8] sm:$0xff] %v245
  // Predicated region
  $region30: #{transition_simple_forward.1} parent=0 // pred_check
    _
  $region31: #{transition_simple_forward.1} parent=0 // pred_check_branch
    %250 = sbr.rel (0) target = $region33
  $region32: #{transition_simple_forward.1} parent=0 // pred_region
    _
  $region33: #{transition_simple_forward.1} parent=0 // pred_fallthru
    _
  // Predicated region
  $region34: #{transition_simple_forward.1} parent=0 // pred_check
    _
  $region35: #{transition_simple_forward.1} parent=0 // pred_check_branch
    %252 = sbr.rel (0) target = $region37
  $region36: #{transition_simple_forward.1} parent=0 // pred_region
    _
  $region37: #{transition_simple_forward.1} parent=0 // pred_fallthru
    _

</llo_original>
